<compile_context>
chip_gen: v6e
topology: v6e:2x2x1
jax: 0.10.0
libtpu: 0.0.40
codegen_flags: <defaults>
</compile_context>

<pallas_src>
import jax
import jax.numpy as jnp
import numpy as np
from jax.experimental import pallas as pl
from jax.experimental.pallas import tpu as pltpu


def _round_up(x, m):
    return ((x + m - 1) // m) * m


def _pick_k_tile(h, target=512):
    """Contraction tile for the encoder matmul (full H when H is small)."""
    if h <= target:
        return h
    for tk in range(target, 127, -128):
        if h % tk == 0:
            return tk
    return h


def _sender_kernel(emb_ref, w_enc_ref, b_enc_ref, w_head_ref, b_head_ref,
                   logits_ref, acc_ref):
    # emb_ref:    (RT, TK)  bf16  token embeddings (row tile, K tile)
    # w_enc_ref:  (TK, H)   bf16  stand-in encoder weight (K tile)
    # b_enc_ref:  (1, H)    f32
    # w_head_ref: (L, H)    bf16  stacked rationale-head weights
    # b_head_ref: (L, 1)    f32
    # logits_ref: (L, RT)   f32   lane-dense output (rows on the 128-lane axis)
    # acc_ref:    (RT, H)   f32   encoder-matmul accumulator (VMEM scratch)
    k = pl.program_id(1)

    @pl.when(k == 0)
    def _():
        acc_ref[...] = jnp.zeros_like(acc_ref)

    # Encoder matmul, accumulated over the K grid axis on the MXU (f32 acc).
    acc_ref[...] += jnp.dot(emb_ref[...], w_enc_ref[...],
                            preferred_element_type=jnp.float32)

    @pl.when(k == pl.num_programs(1) - 1)
    def _():
        # "model": dense + tanh -> last_hidden_state tile [RT, H] (f32 epilogue)
        hidden = jnp.tanh(acc_ref[...] + b_enc_ref[...])
        # Rationale heads: contract H directly -> [L, RT].
        # No in-kernel transposes; output is lane-dense on the row axis.
        logits = jax.lax.dot_general(
            w_head_ref[...], hidden.astype(jnp.bfloat16),
            dimension_numbers=(((1,), (1,)), ((), ())),
            preferred_element_type=jnp.float32)
        logits_ref[...] = (logits + b_head_ref[...]).astype(logits_ref.dtype)


def sender_forward(input_ids, embedding, w_enc, b_enc, w_head, b_head,
                   row_tile=128):
    """Returns (logits, probs), each [B, L, T] — the Bernoulli parameters."""
    B, T = input_ids.shape
    H = embedding.shape[1]
    L = w_head.shape[0]
    R = B * T
    R_pad = _round_up(R, row_tile)
    k_tile = _pick_k_tile(H)
    num_row_tiles = R_pad // row_tile
    num_k_tiles = H // k_tile

    # Glue: embedding lookup (gather) stays in plain JAX; inputs go bf16 so the
    # HBM->VMEM DMAs and MXU pushes are half-width (accumulation stays f32).
    # TODO(synk): fuse the gather into the kernel (scalar-prefetched ids +
    # manual DMA gather from an HBM-resident table) to save one activation
    # round trip through HBM.
    emb = jnp.take(embedding.astype(jnp.bfloat16), input_ids.reshape(-1),
                   axis=0)                                    # [R, H] bf16
    emb = jnp.pad(emb, ((0, R_pad - R), (0, 0)))              # [R_pad, H]

    w_enc_bf = w_enc.astype(jnp.bfloat16)                     # [H, H]
    w_head_bf = w_head.astype(jnp.bfloat16)                   # [L, H]
    b_enc2 = b_enc.reshape(1, H).astype(jnp.float32)
    b_head2 = b_head.reshape(L, 1).astype(jnp.float32)

    flops = 2 * R_pad * H * (H + L)
    bytes_accessed = (emb.size * 2 + w_enc_bf.size * 2 + w_head_bf.size * 2
                      + (H + L) * 4 + L * R_pad * 4)
    vmem_bytes = (2 * row_tile * k_tile * 2      # emb tile, double-buffered
                  + 2 * k_tile * H * 2           # w_enc tile, double-buffered
                  + 2 * L * row_tile * 4         # logits out, double-buffered
                  + row_tile * H * 4             # f32 accumulator scratch
                  + 2 * (L * H * 2 + H * 4 + L * 4))  # heads + biases
    vmem_limit = min(max(4 * vmem_bytes, 8 * 1024 * 1024), 64 * 1024 * 1024)

    grid_spec = pltpu.PrefetchScalarGridSpec(
        num_scalar_prefetch=0,
        grid=(num_row_tiles, num_k_tiles),
        in_specs=[
            pl.BlockSpec((row_tile, k_tile), lambda i, k: (i, k)),
            pl.BlockSpec((k_tile, H), lambda i, k: (k, 0)),
            pl.BlockSpec((1, H), lambda i, k: (0, 0)),
            pl.BlockSpec((L, H), lambda i, k: (0, 0)),
            pl.BlockSpec((L, 1), lambda i, k: (0, 0)),
        ],
        out_specs=pl.BlockSpec((L, row_tile), lambda i, k: (0, i)),
        scratch_shapes=[pltpu.VMEM((row_tile, H), jnp.float32)],
    )

    logits_lr = pl.pallas_call(
        _sender_kernel,
        out_shape=jax.ShapeDtypeStruct((L, R_pad), jnp.float32),
        grid_spec=grid_spec,
        compiler_params=pltpu.CompilerParams(
            dimension_semantics=("parallel", "arbitrary"),
            vmem_limit_bytes=vmem_limit,
        ),
        cost_estimate=pl.CostEstimate(
            flops=flops, transcendentals=R_pad * H,
            bytes_accessed=bytes_accessed),
    )(emb, w_enc_bf, b_enc2, w_head_bf, b_head2)

    # Wrapper-side layout plumbing: [L, B*T] -> [B, L, T], matching
    # torch.stack(..., dim=1) of the squeezed per-head outputs.
    logits = logits_lr[:, :R].reshape(L, B, T).transpose(1, 0, 2)
    probs = jax.nn.sigmoid(logits)   # Bernoulli(logits=...).probs
    return logits, probs


def _reference(input_ids, embedding, w_enc, b_enc, w_head, b_head):
    emb = jnp.take(embedding, input_ids, axis=0)                       # [B,T,H]
    hidden = jnp.tanh(jnp.einsum("bth,hk->btk", emb, w_enc) + b_enc)
    logits = jnp.einsum("bth,lh->blt", hidden, w_head) + b_head[None, :, None]
    return logits, jax.nn.sigmoid(logits)


if __name__ == "__main__":
    B, T, H, L, VOCAB = 2, 8, 32, 11, 64  # small shapes consistent with [B, T]

    key = jax.random.PRNGKey(0)
    k_ids, k_emb, k_we, k_be, k_wh, k_bh = jax.random.split(key, 6)

    input_ids = jax.random.randint(k_ids, (B, T), 0, VOCAB, dtype=jnp.int32)
    embedding = jax.random.normal(k_emb, (VOCAB, H), dtype=jnp.float32) * 0.1
    w_enc = jax.random.normal(k_we, (H, H), dtype=jnp.float32) * 0.1
    b_enc = jax.random.normal(k_be, (H,), dtype=jnp.float32) * 0.1
    w_head = jax.random.normal(k_wh, (L, H), dtype=jnp.float32) * 0.1
    b_head = jax.random.normal(k_bh, (L,), dtype=jnp.float32) * 0.1

    logits, probs = sender_forward(input_ids, embedding, w_enc, b_enc,
                                   w_head, b_head)
    jax.block_until_ready((logits, probs))

    ref_logits, ref_probs = _reference(input_ids, embedding, w_enc, b_enc,
                                       w_head, b_head)
    assert logits.shape == (B, L, T) and probs.shape == (B, L, T)
    # bf16 operands (f32 accumulation) -> looser tolerance than pure f32.
    np.testing.assert_allclose(np.asarray(logits), np.asarray(ref_logits),
                               rtol=2e-2, atol=1e-2)
    np.testing.assert_allclose(np.asarray(probs), np.asarray(ref_probs),
                               rtol=2e-2, atol=1e-2)

    print("KERNEL_OK")
</pallas_src>

<mosaic_0001>
module attributes {stable_mosaic.version = 11 : i64} {
  func.func @_sender_kernel(%arg0: i32, %arg1: i32, %arg2: memref<128x32xbf16, #tpu.memory_space<vmem>>, %arg3: memref<32x32xbf16, #tpu.memory_space<vmem>>, %arg4: memref<1x32xf32, #tpu.memory_space<vmem>>, %arg5: memref<11x32xbf16, #tpu.memory_space<vmem>>, %arg6: memref<11x1xf32, #tpu.memory_space<vmem>>, %arg7: memref<11x128xf32, #tpu.memory_space<vmem>>, %arg8: memref<128x32xf32, #tpu.memory_space<vmem>>) attributes {dimension_semantics = [#tpu.dimension_semantics<parallel>, #tpu.dimension_semantics<arbitrary>], iteration_bounds = array<i64: 1, 1>, scalar_prefetch = 0 : i64, scratch_operands = 1 : i64, tpu.core_type = #tpu.core_type<tc>, window_params = [{transform_indices = @transform_0, window_bounds = array<i64: 128, 32>}, {transform_indices = @transform_1, window_bounds = array<i64: 32, 32>}, {pipeline_mode = #tpu.pipeline_mode<synchronous>, transform_indices = @transform_2, window_bounds = array<i64: 1, 32>}, {pipeline_mode = #tpu.pipeline_mode<synchronous>, transform_indices = @transform_3, window_bounds = array<i64: 11, 32>}, {pipeline_mode = #tpu.pipeline_mode<synchronous>, transform_indices = @transform_4, window_bounds = array<i64: 11, 1>}, {transform_indices = @transform_5, window_bounds = array<i64: 11, 128>}]} {
    %c0_i32 = arith.constant 0 : i32
    %0 = arith.cmpi eq, %arg1, %c0_i32 : i32
    %1 = arith.extui %0 : i1 to i32
    %c0_i32_0 = arith.constant 0 : i32
    %2 = arith.cmpi ne, %1, %c0_i32_0 : i32
    scf.if %2 {
      %cst_10 = arith.constant 0.000000e+00 : f32
      %12 = vector.broadcast %cst_10 : f32 to vector<128x32xf32>
      %c0_11 = arith.constant 0 : index
      %c0_12 = arith.constant 0 : index
      %13 = vector.load %arg8[%c0_11, %c0_12] : memref<128x32xf32, #tpu.memory_space<vmem>>, vector<128x32xf32>
      tpu.vector_store %arg8[%c0_11, %c0_12], %12 {strides = array<i32>} : memref<128x32xf32, #tpu.memory_space<vmem>>, vector<128x32xf32>,
    } else {
    }
    %c0 = arith.constant 0 : index
    %c0_1 = arith.constant 0 : index
    %3 = vector.load %arg8[%c0, %c0_1] : memref<128x32xf32, #tpu.memory_space<vmem>>, vector<128x32xf32>
    %c0_2 = arith.constant 0 : index
    %c0_3 = arith.constant 0 : index
    %4 = vector.load %arg2[%c0_2, %c0_3] : memref<128x32xbf16, #tpu.memory_space<vmem>>, vector<128x32xbf16>
    %c0_4 = arith.constant 0 : index
    %c0_5 = arith.constant 0 : index
    %5 = vector.load %arg3[%c0_4, %c0_5] : memref<32x32xbf16, #tpu.memory_space<vmem>>, vector<32x32xbf16>
    %cst = arith.constant dense<0.000000e+00> : vector<128x32xf32>
    %6 = tpu.matmul %4, %5, %cst {dimension_numbers = #tpu.dot_dimension_numbers<[1], [0], [0], [1], [0, 0, 1, 1], [], []>} : vector<128x32xbf16>, vector<32x32xbf16>, vector<128x32xf32> -> vector<128x32xf32>
    %7 = arith.addf %3, %6 : vector<128x32xf32>
    %c0_6 = arith.constant 0 : index
    %c0_7 = arith.constant 0 : index
    %8 = vector.load %arg8[%c0_6, %c0_7] : memref<128x32xf32, #tpu.memory_space<vmem>>, vector<128x32xf32>
    tpu.vector_store %arg8[%c0_6, %c0_7], %7 {strides = array<i32>} : memref<128x32xf32, #tpu.memory_space<vmem>>, vector<128x32xf32>,
    %c0_i32_8 = arith.constant 0 : i32
    %9 = arith.cmpi eq, %arg1, %c0_i32_8 : i32
    %10 = arith.extui %9 : i1 to i32
    %c0_i32_9 = arith.constant 0 : i32
    %11 = arith.cmpi ne, %10, %c0_i32_9 : i32
    scf.if %11 {
      %c0_10 = arith.constant 0 : index
      %c0_11 = arith.constant 0 : index
      %12 = vector.load %arg8[%c0_10, %c0_11] : memref<128x32xf32, #tpu.memory_space<vmem>>, vector<128x32xf32>
      %c0_12 = arith.constant 0 : index
      %c0_13 = arith.constant 0 : index
      %13 = vector.load %arg4[%c0_12, %c0_13] : memref<1x32xf32, #tpu.memory_space<vmem>>, vector<1x32xf32>
      %14 = vector.broadcast %13 : vector<1x32xf32> to vector<128x32xf32>
      %15 = arith.addf %12, %14 : vector<128x32xf32>
      %16 = math.tanh %15 : vector<128x32xf32>
      %c0_14 = arith.constant 0 : index
      %c0_15 = arith.constant 0 : index
      %17 = vector.load %arg5[%c0_14, %c0_15] : memref<11x32xbf16, #tpu.memory_space<vmem>>, vector<11x32xbf16>
      %18 = arith.truncf %16 : vector<128x32xf32> to vector<128x32xbf16>
      %cst_16 = arith.constant dense<0.000000e+00> : vector<11x128xf32>
      %19 = tpu.matmul %17, %18, %cst_16 {dimension_numbers = #tpu.dot_dimension_numbers<[1], [1], [0], [0], [0, 0, 1, 0], [], []>} : vector<11x32xbf16>, vector<128x32xbf16>, vector<11x128xf32> -> vector<11x128xf32>
      %c0_17 = arith.constant 0 : index
      %c0_18 = arith.constant 0 : index
      %20 = vector.load %arg6[%c0_17, %c0_18] : memref<11x1xf32, #tpu.memory_space<vmem>>, vector<11x1xf32>
      %21 = vector.broadcast %20 : vector<11x1xf32> to vector<11x128xf32>
      %22 = arith.addf %19, %21 : vector<11x128xf32>
      %c0_19 = arith.constant 0 : index
      %c0_20 = arith.constant 0 : index
      %23 = vector.load %arg7[%c0_19, %c0_20] : memref<11x128xf32, #tpu.memory_space<vmem>>, vector<11x128xf32>
      tpu.vector_store %arg7[%c0_19, %c0_20], %22 {strides = array<i32>} : memref<11x128xf32, #tpu.memory_space<vmem>>, vector<11x128xf32>,
    } else {
    }
    return
  }
  func.func @transform_0(%arg0: i32, %arg1: i32) -> (i32, i32) {
    %c0_i32 = arith.constant 0 : i32
    return %arg0, %arg1 : i32, i32
  }
  func.func @transform_1(%arg0: i32, %arg1: i32) -> (i32, i32) {
    %c0_i32 = arith.constant 0 : i32
    %c0_i32_0 = arith.constant 0 : i32
    return %arg1, %c0_i32 : i32, i32
  }
  func.func @transform_2(%arg0: i32, %arg1: i32) -> (i32, i32) {
    %c0_i32 = arith.constant 0 : i32
    %c0_i32_0 = arith.constant 0 : i32
    %c0_i32_1 = arith.constant 0 : i32
    return %c0_i32, %c0_i32_0 : i32, i32
  }
  func.func @transform_3(%arg0: i32, %arg1: i32) -> (i32, i32) {
    %c0_i32 = arith.constant 0 : i32
    %c0_i32_0 = arith.constant 0 : i32
    %c0_i32_1 = arith.constant 0 : i32
    return %c0_i32, %c0_i32_0 : i32, i32
  }
  func.func @transform_4(%arg0: i32, %arg1: i32) -> (i32, i32) {
    %c0_i32 = arith.constant 0 : i32
    %c0_i32_0 = arith.constant 0 : i32
    %c0_i32_1 = arith.constant 0 : i32
    return %c0_i32, %c0_i32_0 : i32, i32
  }
  func.func @transform_5(%arg0: i32, %arg1: i32) -> (i32, i32) {
    %c0_i32 = arith.constant 0 : i32
    %c0_i32_0 = arith.constant 0 : i32
    return %c0_i32, %arg0 : i32, i32
  }
}

</mosaic_0001>

<llo_original>
// kernel: tpu_custom_call.1
$region0: #{tpu_custom_call.1}
  #allocation0 [shape = 'u32[]', space=smem, size = 0x4, offset = 0x4, fixed_abs, tag = 'smem constant byte address 0x4 - core index']
  #allocation1 [shape = 'u32[144,128]{1,0:T(1,128)}', space=vmem, size = 0x12000, scoped, tag = 'internal scratch']
  #allocation2 [shape = 'f32[128,32]{1,0:T(8,128)}', space=vmem, size = 0x10000, scoped, tag = 'scratch operand']
  %s0 = inlined_call_operand.vmem [shape: bf16[128,32], index: 0, kind: input, shape index: {}]
  %s1 = inlined_call_operand.vmem [shape: bf16[32,32], index: 1, kind: input, shape index: {}]
  %s2 = inlined_call_operand.vmem [shape: f32[1,32], index: 2, kind: input, shape index: {}]
  %s3 = inlined_call_operand.vmem [shape: bf16[11,32], index: 3, kind: input, shape index: {}]
  %s4 = inlined_call_operand.vmem [shape: f32[11,1], index: 4, kind: input, shape index: {}]
  %s5 = inlined_call_operand.hbm [shape: f32[11,128], index: 5, kind: output, shape index: {}]
  %s6 = sld [smem:[#allocation0]]
  $region38: #{tpu_custom_call.1} parent=0
    _
  %s8 = ssub.s32 1, %s6
  %s9 = scalar_select 0, %s8, %s6
  $region1: #{tpu_custom_call.1} parent=0
    #allocation3 [shape = 'u8[8192]{0}', space=vmem, size = 0x2000, scoped, tag = 'output window, operand 0, single buffered']
    #allocation4 [shape = 's32[1]{0}', space=sflag, size = 0x4, scoped, tag = 'scoped memory for tpu_custom_call.1']
    %10 = vsyncpa [#allocation4], 0
    // Predicated region
    $region2: #{tpu_custom_call.1} parent=1 // pred_check
      _
    $region3: #{tpu_custom_call.1} parent=1 // pred_check_branch
      %12 = sbr.rel (0) target = $region5
    $region4: #{tpu_custom_call.1} parent=1 // pred_region
      _
    $region5: #{tpu_custom_call.1} parent=1 // pred_fallthru
      _
    // Predicated region
    $region6: #{tpu_custom_call.1} parent=1 // pred_check
      _
    $region7: #{tpu_custom_call.1} parent=1 // pred_check_branch
      %14 = sbr.rel (0) target = $region9
    $region8: #{tpu_custom_call.1} parent=1 // pred_region
      _
    $region9: #{tpu_custom_call.1} parent=1 // pred_fallthru
      _
    // Predicated region
    $region10: #{tpu_custom_call.1} parent=1 // pred_check
      _
    $region11: #{tpu_custom_call.1} parent=1 // pred_check_branch
      %16 = sbr.rel (0) target = $region13
    $region12: #{tpu_custom_call.1} parent=1 // pred_region
      _
    $region13: #{tpu_custom_call.1} parent=1 // pred_fallthru
      _
    // Predicated region
    $region14: #{tpu_custom_call.1} parent=1 // pred_check
      _
    $region15: #{tpu_custom_call.1} parent=1 // pred_check_branch
      %18 = sbr.rel (0) target = $region17
    $region16: #{tpu_custom_call.1} parent=1 // pred_region
      _
    $region17: #{tpu_custom_call.1} parent=1 // pred_fallthru
      _
    // Predicated region
    $region18: #{tpu_custom_call.1} parent=1 // pred_check
      _
    $region19: #{tpu_custom_call.1} parent=1 // pred_check_branch
      %20 = sbr.rel (0) target = $region21
    $region20: #{tpu_custom_call.1} parent=1 // pred_region
      _
    $region21: #{tpu_custom_call.1} parent=1 // pred_fallthru
      _
    %p22 = scmp.eq.s32.totalorder 0, 0
    // Predicated region
    $region22: #{tpu_custom_call.1} parent=1 // pred_check
      %p23 = pneg %p22
    $region23: #{tpu_custom_call.1} parent=1 // pred_check_branch
      %25 = sbr.rel (%p23) target = $region25
    $region24: #{tpu_custom_call.1} parent=1 // pred_region
      %vm26 = vcmask 261120
      %27 = vst.msk [vmem:[#allocation2] sm:$0xff] %vm26, 0.0
      %28 = vst.msk [vmem:[#allocation2 + $0x8] sm:$0xff] %vm26, 0.0
      %29 = vst.msk [vmem:[#allocation2 + $0x10] sm:$0xff] %vm26, 0.0
      %30 = vst.msk [vmem:[#allocation2 + $0x18] sm:$0xff] %vm26, 0.0
      %31 = vst.msk [vmem:[#allocation2 + $0x20] sm:$0xff] %vm26, 0.0
      %32 = vst.msk [vmem:[#allocation2 + $0x28] sm:$0xff] %vm26, 0.0
      %33 = vst.msk [vmem:[#allocation2 + $0x30] sm:$0xff] %vm26, 0.0
      %34 = vst.msk [vmem:[#allocation2 + $0x38] sm:$0xff] %vm26, 0.0
      %35 = vst.msk [vmem:[#allocation2 + $0x40] sm:$0xff] %vm26, 0.0
      %36 = vst.msk [vmem:[#allocation2 + $0x48] sm:$0xff] %vm26, 0.0
      %37 = vst.msk [vmem:[#allocation2 + $0x50] sm:$0xff] %vm26, 0.0
      %38 = vst.msk [vmem:[#allocation2 + $0x58] sm:$0xff] %vm26, 0.0
      %39 = vst.msk [vmem:[#allocation2 + $0x60] sm:$0xff] %vm26, 0.0
      %40 = vst.msk [vmem:[#allocation2 + $0x68] sm:$0xff] %vm26, 0.0
      %41 = vst.msk [vmem:[#allocation2 + $0x70] sm:$0xff] %vm26, 0.0
      %42 = vst.msk [vmem:[#allocation2 + $0x78] sm:$0xff] %vm26, 0.0
    $region25: #{tpu_custom_call.1} parent=1 // pred_fallthru
      _
    %v43 = vld [vmem:[#allocation2] sm:$0xff]
    %v44 = vld [vmem:[#allocation2 + $0x8] sm:$0xff]
    %v45 = vld [vmem:[#allocation2 + $0x10] sm:$0xff]
    %v46 = vld [vmem:[#allocation2 + $0x18] sm:$0xff]
    %v47 = vld [vmem:[#allocation2 + $0x20] sm:$0xff]
    %v48 = vld [vmem:[#allocation2 + $0x28] sm:$0xff]
    %v49 = vld [vmem:[#allocation2 + $0x30] sm:$0xff]
    %v50 = vld [vmem:[#allocation2 + $0x38] sm:$0xff]
    %v51 = vld [vmem:[#allocation2 + $0x40] sm:$0xff]
    %v52 = vld [vmem:[#allocation2 + $0x48] sm:$0xff]
    %v53 = vld [vmem:[#allocation2 + $0x50] sm:$0xff]
    %v54 = vld [vmem:[#allocation2 + $0x58] sm:$0xff]
    %v55 = vld [vmem:[#allocation2 + $0x60] sm:$0xff]
    %v56 = vld [vmem:[#allocation2 + $0x68] sm:$0xff]
    %v57 = vld [vmem:[#allocation2 + $0x70] sm:$0xff]
    %v58 = vld [vmem:[#allocation2 + $0x78] sm:$0xff]
    %v59 = vld [vmem:[%s0] sm:$0xf]
    %v60 = vld [vmem:[%s0 + $0x4] sm:$0xf]
    %v61 = vld [vmem:[%s0 + $0x8] sm:$0xf]
    %v62 = vld [vmem:[%s0 + $0xc] sm:$0xf]
    %v63 = vld [vmem:[%s0 + $0x10] sm:$0xf]
    %v64 = vld [vmem:[%s0 + $0x14] sm:$0xf]
    %v65 = vld [vmem:[%s0 + $0x18] sm:$0xf]
    %v66 = vld [vmem:[%s0 + $0x1c] sm:$0xf]
    %v67 = vld [vmem:[%s0 + $0x20] sm:$0xf]
    %v68 = vld [vmem:[%s0 + $0x24] sm:$0xf]
    %v69 = vld [vmem:[%s0 + $0x28] sm:$0xf]
    %v70 = vld [vmem:[%s0 + $0x2c] sm:$0xf]
    %v71 = vld [vmem:[%s0 + $0x30] sm:$0xf]
    %v72 = vld [vmem:[%s0 + $0x34] sm:$0xf]
    %v73 = vld [vmem:[%s0 + $0x38] sm:$0xf]
    %v74 = vld [vmem:[%s0 + $0x3c] sm:$0xf]
    %v75 = vld [vmem:[%s1] sm:$0xf]
    %v76 = vld [vmem:[%s1 + $0x4] sm:$0xf]
    %v77 = vld [vmem:[%s1 + $0x8] sm:$0xf]
    %v78 = vld [vmem:[%s1 + $0xc] sm:$0xf]
    %v95 = vunpack.c.l.b16 %v59
    %v96 = vunpack.c.l.b16 %v60
    %v97 = vunpack.c.l.b16 %v61
    %v98 = vunpack.c.l.b16 %v62
    %v99 = vunpack.c.l.b16 %v63
    %v100 = vunpack.c.l.b16 %v64
    %v101 = vunpack.c.l.b16 %v65
    %v102 = vunpack.c.l.b16 %v66
    %v103 = vunpack.c.l.b16 %v67
    %v104 = vunpack.c.l.b16 %v68
    %v105 = vunpack.c.l.b16 %v69
    %v106 = vunpack.c.l.b16 %v70
    %v107 = vunpack.c.l.b16 %v71
    %v108 = vunpack.c.l.b16 %v72
    %v109 = vunpack.c.l.b16 %v73
    %v110 = vunpack.c.l.b16 %v74
    %v111 = vpack.c.b16 %v96, %v95
    %v112 = vpack.c.b16 %v98, %v97
    %v113 = vpack.c.b16 %v100, %v99
    %v114 = vpack.c.b16 %v102, %v101
    %v115 = vpack.c.b16 %v104, %v103
    %v116 = vpack.c.b16 %v106, %v105
    %v117 = vpack.c.b16 %v108, %v107
    %v118 = vpack.c.b16 %v110, %v109
    %v123 = vunpack.c.l.b16 %v75
    %v124 = vunpack.c.l.b16 %v76
    %v125 = vunpack.c.l.b16 %v77
    %v126 = vunpack.c.l.b16 %v78
    %v127 = vpack.c.b16 %v124, %v123
    %v128 = vpack.c.b16 %v126, %v125
    %vm131 = vcmask 261120
    %v133 = vsel %vm131, %v111, 0
    %v136 = vsel %vm131, %v112, 0
    %v139 = vsel %vm131, %v113, 0
    %v142 = vsel %vm131, %v114, 0
    %v145 = vsel %vm131, %v115, 0
    %v148 = vsel %vm131, %v116, 0
    %v151 = vsel %vm131, %v117, 0
    %v154 = vsel %vm131, %v118, 0
    %156 = vmatprep.subr.bf16.mxu0 0
    %157 = vmatpush1.bf16.msra.mxu0 0
    %158 = vmatprep.subr.bf16.mxu0 0
    %159 = vmatpush1.bf16.msra.mxu0 0
    %160 = vmatprep.subr.bf16.mxu0 0
    %161 = vmatpush1.bf16.msra.mxu0 0
    %162 = vmatprep.subr.bf16.mxu0 0
    %163 = vmatpush1.bf16.msra.mxu0 0
    %164 = vmatprep.subr.bf16.mxu0 0
    %165 = vmatpush1.bf16.msra.mxu0 0
    %166 = vmatprep.subr.bf16.mxu0 0
    %167 = vmatpush1.bf16.msra.mxu0 0
    %168 = vmatprep.subr.bf16.mxu0 0
    %169 = vmatpush1.bf16.msra.mxu0 %v128
    %170 = vmatprep.subr.bf16.mxu0 0
    %171 = vmatpush1.bf16.msra.mxu0 %v127
    %172 = vmatprep.subr.bf16.mxu0 0
    %173 = vmatpush2.bf16.msra.mxu0 0
    %174 = vmatprep.subr.bf16.mxu0 0
    %175 = vmatpush2.bf16.msra.mxu0 0
    %176 = vmatprep.subr.bf16.mxu0 0
    %177 = vmatpush2.bf16.msra.mxu0 0
    %178 = vmatprep.subr.bf16.mxu0 0
    %179 = vmatpush2.bf16.msra.mxu0 0
    %180 = vmatprep.subr.bf16.mxu0 0
    %181 = vmatpush2.bf16.msra.mxu0 0
    %182 = vmatprep.subr.bf16.mxu0 0
    %183 = vmatpush2.bf16.msra.mxu0 0
    %184 = vmatprep.subr.bf16.mxu0 0
    %185 = vmatpush2.bf16.msra.mxu0 0
    %186 = vmatprep.subr.bf16.mxu0 0
    %187 = vmatpush2.bf16.msra.mxu0 0
    %188 = vmatprep.mubr.bf16.mxu0 0
    %189 = vmatmul.mubr.bf16.gmra.mxu0 %v133
    %v190 = vpop.f32.mrf.mxu0
    %v191 = vadd.f32 0.0, %v190
    %v192 = vpop.f32.mrf.mxu0
    %v193 = vpop.f32.mrf.mxu0
    %v194 = vadd.f32 0.0, %v193
    %v195 = vpop.f32.mrf.mxu0
    %196 = vmatprep.mubr.bf16.mxu0 0
    %197 = vmatmul.mubr.bf16.gmra.mxu0 %v136
    %v198 = vpop.f32.mrf.mxu0
    %v199 = vadd.f32 0.0, %v198
    %v200 = vpop.f32.mrf.mxu0
    %v201 = vpop.f32.mrf.mxu0
    %v202 = vadd.f32 0.0, %v201
    %v203 = vpop.f32.mrf.mxu0
    %204 = vmatprep.mubr.bf16.mxu0 0
    %205 = vmatmul.mubr.bf16.gmra.mxu0 %v139
    %v206 = vpop.f32.mrf.mxu0
    %v207 = vadd.f32 0.0, %v206
    %v208 = vpop.f32.mrf.mxu0
    %v209 = vpop.f32.mrf.mxu0
    %v210 = vadd.f32 0.0, %v209
    %v211 = vpop.f32.mrf.mxu0
    %212 = vmatprep.mubr.bf16.mxu0 0
    %213 = vmatmul.mubr.bf16.gmra.mxu0 %v142
    %v214 = vpop.f32.mrf.mxu0
    %v215 = vadd.f32 0.0, %v214
    %v216 = vpop.f32.mrf.mxu0
    %v217 = vpop.f32.mrf.mxu0
    %v218 = vadd.f32 0.0, %v217
    %v219 = vpop.f32.mrf.mxu0
    %220 = vmatprep.mubr.bf16.mxu0 0
    %221 = vmatmul.mubr.bf16.gmra.mxu0 %v145
    %v222 = vpop.f32.mrf.mxu0
    %v223 = vadd.f32 0.0, %v222
    %v224 = vpop.f32.mrf.mxu0
    %v225 = vpop.f32.mrf.mxu0
    %v226 = vadd.f32 0.0, %v225
    %v227 = vpop.f32.mrf.mxu0
    %228 = vmatprep.mubr.bf16.mxu0 0
    %229 = vmatmul.mubr.bf16.gmra.mxu0 %v148
    %v230 = vpop.f32.mrf.mxu0
    %v231 = vadd.f32 0.0, %v230
    %v232 = vpop.f32.mrf.mxu0
    %v233 = vpop.f32.mrf.mxu0
    %v234 = vadd.f32 0.0, %v233
    %v235 = vpop.f32.mrf.mxu0
    %236 = vmatprep.mubr.bf16.mxu0 0
    %237 = vmatmul.mubr.bf16.gmra.mxu0 %v151
    %v238 = vpop.f32.mrf.mxu0
    %v239 = vadd.f32 0.0, %v238
    %v240 = vpop.f32.mrf.mxu0
    %v241 = vpop.f32.mrf.mxu0
    %v242 = vadd.f32 0.0, %v241
    %v243 = vpop.f32.mrf.mxu0
    %244 = vmatprep.mubr.bf16.mxu0 0
    %245 = vmatmul.mubr.bf16.gmra.mxu0 %v154
    %v246 = vpop.f32.mrf.mxu0
    %v247 = vadd.f32 0.0, %v246
    %v248 = vpop.f32.mrf.mxu0
    %v249 = vpop.f32.mrf.mxu0
    %v250 = vadd.f32 0.0, %v249
    %v251 = vpop.f32.mrf.mxu0
    %252 = vdwg.mxu0
    %v253 = vadd.f32 %v43, %v191
    %v254 = vadd.f32 %v44, %v194
    %v255 = vadd.f32 %v45, %v199
    %v256 = vadd.f32 %v46, %v202
    %v257 = vadd.f32 %v47, %v207
    %v258 = vadd.f32 %v48, %v210
    %v259 = vadd.f32 %v49, %v215
    %v260 = vadd.f32 %v50, %v218
    %v261 = vadd.f32 %v51, %v223
    %v262 = vadd.f32 %v52, %v226
    %v263 = vadd.f32 %v53, %v231
    %v264 = vadd.f32 %v54, %v234
    %v265 = vadd.f32 %v55, %v239
    %v266 = vadd.f32 %v56, %v242
    %v267 = vadd.f32 %v57, %v247
    %v268 = vadd.f32 %v58, %v250
    %269 = vst.msk [vmem:[#allocation2] sm:$0xff] %vm131, %v253
    %270 = vst.msk [vmem:[#allocation2 + $0x8] sm:$0xff] %vm131, %v254
    %271 = vst.msk [vmem:[#allocation2 + $0x10] sm:$0xff] %vm131, %v255
    %272 = vst.msk [vmem:[#allocation2 + $0x18] sm:$0xff] %vm131, %v256
    %273 = vst.msk [vmem:[#allocation2 + $0x20] sm:$0xff] %vm131, %v257
    %274 = vst.msk [vmem:[#allocation2 + $0x28] sm:$0xff] %vm131, %v258
    %275 = vst.msk [vmem:[#allocation2 + $0x30] sm:$0xff] %vm131, %v259
    %276 = vst.msk [vmem:[#allocation2 + $0x38] sm:$0xff] %vm131, %v260
    %277 = vst.msk [vmem:[#allocation2 + $0x40] sm:$0xff] %vm131, %v261
    %278 = vst.msk [vmem:[#allocation2 + $0x48] sm:$0xff] %vm131, %v262
    %279 = vst.msk [vmem:[#allocation2 + $0x50] sm:$0xff] %vm131, %v263
    %280 = vst.msk [vmem:[#allocation2 + $0x58] sm:$0xff] %vm131, %v264
    %281 = vst.msk [vmem:[#allocation2 + $0x60] sm:$0xff] %vm131, %v265
    %282 = vst.msk [vmem:[#allocation2 + $0x68] sm:$0xff] %vm131, %v266
    %283 = vst.msk [vmem:[#allocation2 + $0x70] sm:$0xff] %vm131, %v267
    %284 = vst.msk [vmem:[#allocation2 + $0x78] sm:$0xff] %vm131, %v268
    // Predicated region
    $region26: #{tpu_custom_call.1} parent=1 // pred_check
      %p285 = pneg %p22
    $region27: #{tpu_custom_call.1} parent=1 // pred_check_branch
      %287 = sbr.rel (%p285) target = $region29
    $region28: #{tpu_custom_call.1} parent=1 // pred_region
      %v288 = vld [vmem:[#allocation2] sm:$0xff]
      %v289 = vld [vmem:[#allocation2 + $0x8] sm:$0xff]
      %v290 = vld [vmem:[#allocation2 + $0x10] sm:$0xff]
      %v291 = vld [vmem:[#allocation2 + $0x18] sm:$0xff]
      %v292 = vld [vmem:[#allocation2 + $0x20] sm:$0xff]
      %v293 = vld [vmem:[#allocation2 + $0x28] sm:$0xff]
      %v294 = vld [vmem:[#allocation2 + $0x30] sm:$0xff]
      %v295 = vld [vmem:[#allocation2 + $0x38] sm:$0xff]
      %v296 = vld [vmem:[#allocation2 + $0x40] sm:$0xff]
      %v297 = vld [vmem:[#allocation2 + $0x48] sm:$0xff]
      %v298 = vld [vmem:[#allocation2 + $0x50] sm:$0xff]
      %v299 = vld [vmem:[#allocation2 + $0x58] sm:$0xff]
      %v300 = vld [vmem:[#allocation2 + $0x60] sm:$0xff]
      %v301 = vld [vmem:[#allocation2 + $0x68] sm:$0xff]
      %v302 = vld [vmem:[#allocation2 + $0x70] sm:$0xff]
      %v303 = vld [vmem:[#allocation2 + $0x78] sm:$0xff]
      %v304 = vld [vmem:[%s2] sm:$0x1]
      %v306 = vlaneseq
      %v307 = vshrl.u32 %v306, 7
      %v308 = vsub.s32 0, %v307
      %v309 = vrot.slane %v304, %v308
      %v311 = vadd.f32 %v288, %v309
      %v312 = vadd.f32 %v289, %v309
      %v313 = vadd.f32 %v290, %v309
      %v314 = vadd.f32 %v291, %v309
      %v315 = vadd.f32 %v292, %v309
      %v316 = vadd.f32 %v293, %v309
      %v317 = vadd.f32 %v294, %v309
      %v318 = vadd.f32 %v295, %v309
      %v319 = vadd.f32 %v296, %v309
      %v320 = vadd.f32 %v297, %v309
      %v321 = vadd.f32 %v298, %v309
      %v322 = vadd.f32 %v299, %v309
      %v323 = vadd.f32 %v300, %v309
      %v324 = vadd.f32 %v301, %v309
      %v325 = vadd.f32 %v302, %v309
      %v326 = vadd.f32 %v303, %v309
      %v327 = vtanh.pop %v311
      %v328 = vtanh.pop %v312
      %v329 = vtanh.pop %v313
      %v330 = vtanh.pop %v314
      %v331 = vtanh.pop %v315
      %v332 = vtanh.pop %v316
      %v333 = vtanh.pop %v317
      %v334 = vtanh.pop %v318
      %v335 = vtanh.pop %v319
      %v336 = vtanh.pop %v320
      %v337 = vtanh.pop %v321
      %v338 = vtanh.pop %v322
      %v339 = vtanh.pop %v323
      %v340 = vtanh.pop %v324
      %v341 = vtanh.pop %v325
      %v342 = vtanh.pop %v326
      %v343 = vld [vmem:[%s3] sm:$0xf]
      %v344 = vld [vmem:[%s3 + $0x4] sm:$0x3]
      %v345 = vpack.c.bf16 %v328, %v327
      %v346 = vpack.c.bf16 %v330, %v329
      %v347 = vpack.c.bf16 %v332, %v331
      %v348 = vpack.c.bf16 %v334, %v333
      %v349 = vpack.c.bf16 %v336, %v335
      %v350 = vpack.c.bf16 %v338, %v337
      %v351 = vpack.c.bf16 %v340, %v339
      %v352 = vpack.c.bf16 %v342, %v341
      %v353 = vld [vmem:[%s4] sm:$0xff]
      %v354 = vld [vmem:[%s4 + $0x8] sm:$0x7]
      %356 = vset.pattern.permute.xlu0 0
      %357 = vperm.xlu0 %356, %v353
      %v358 = vpop.permute.xlu0 %357
      %361 = vset.pattern.permute.xlu0 0
      %362 = vperm.xlu0 %361, %v354
      %v363 = vpop.permute.xlu0 %362
      %v367 = vunpack.c.l.b16 %v343
      %v368 = vunpack.c.l.b16 %v344
      %v369 = vpack.c.b16 %v368, %v367
      %v371 = vsel %vm131, %v369, 0
      %v374 = vsel %vm131, %v345, 0
      %v377 = vsel %vm131, %v346, 0
      %v380 = vsel %vm131, %v347, 0
      %v383 = vsel %vm131, %v348, 0
      %v386 = vsel %vm131, %v349, 0
      %v389 = vsel %vm131, %v350, 0
      %v392 = vsel %vm131, %v351, 0
      %v395 = vsel %vm131, %v352, 0
      %397 = vmatprep.subr.bf16.mxu0 0
      %398 = vmatpush1.bf16.xpose.msra.mxu0 %v395
      %399 = vmatprep.subr.bf16.mxu0 0
      %400 = vmatpush1.bf16.xpose.msra.mxu0 %v392
      %401 = vmatprep.subr.bf16.mxu0 0
      %402 = vmatpush1.bf16.xpose.msra.mxu0 %v389
      %403 = vmatprep.subr.bf16.mxu0 0
      %404 = vmatpush1.bf16.xpose.msra.mxu0 %v386
      %405 = vmatprep.subr.bf16.mxu0 0
      %406 = vmatpush1.bf16.xpose.msra.mxu0 %v383
      %407 = vmatprep.subr.bf16.mxu0 0
      %408 = vmatpush1.bf16.xpose.msra.mxu0 %v380
      %409 = vmatprep.subr.bf16.mxu0 0
      %410 = vmatpush1.bf16.xpose.msra.mxu0 %v377
      %411 = vmatprep.subr.bf16.mxu0 0
      %412 = vmatpush1.bf16.xpose.msra.mxu0 %v374
      %413 = vmatprep.subr.bf16.mxu0 0
      %414 = vmatpush2.bf16.xpose.msra.mxu0 0
      %415 = vmatprep.subr.bf16.mxu0 0
      %416 = vmatpush2.bf16.xpose.msra.mxu0 0
      %417 = vmatprep.subr.bf16.mxu0 0
      %418 = vmatpush2.bf16.xpose.msra.mxu0 0
      %419 = vmatprep.subr.bf16.mxu0 0
      %420 = vmatpush2.bf16.xpose.msra.mxu0 0
      %421 = vmatprep.subr.bf16.mxu0 0
      %422 = vmatpush2.bf16.xpose.msra.mxu0 0
      %423 = vmatprep.subr.bf16.mxu0 0
      %424 = vmatpush2.bf16.xpose.msra.mxu0 0
      %425 = vmatprep.subr.bf16.mxu0 0
      %426 = vmatpush2.bf16.xpose.msra.mxu0 0
      %427 = vmatprep.subr.bf16.mxu0 0
      %428 = vmatpush2.bf16.xpose.msra.mxu0 0
      %429 = vmatprep.mubr.bf16.mxu0 0
      %430 = vmatmul.mubr.bf16.gmra.mxu0 %v371
      %v431 = vpop.f32.mrf.mxu0
      %v432 = vadd.f32 %v358, %v431
      %v433 = vpop.f32.mrf.mxu0
      %v434 = vpop.f32.mrf.mxu0
      %v435 = vadd.f32 %v363, %v434
      %v436 = vpop.f32.mrf.mxu0
      %437 = vdwg.mxu0
      %438 = vst [vmem:[#allocation3] sm:$0xff] %v432
      %439 = vst [vmem:[#allocation3 + $0x8] sm:$0x7] %v435
    $region29: #{tpu_custom_call.1} parent=1 // pred_fallthru
      _
    // Predicated region
    $region30: #{tpu_custom_call.1} parent=1 // pred_check
      _
    $region31: #{tpu_custom_call.1} parent=1 // pred_check_branch
      %441 = sbr.rel (0) target = $region33
    $region32: #{tpu_custom_call.1} parent=1 // pred_region
      %s443 = ssub.s32 256, 256
      %444 = vsyncadd [#allocation4], %s443
      %s445 = sshll.u32 [#allocation3], 4
      %s446 = int_to_ptr.vmem [resolvable:$true] %s445
      %451 = dma.vmem_to_hbm [thread:$0]  %s446, 256, %s5, [#allocation4], 128, 128, 8
    $region33: #{tpu_custom_call.1} parent=1 // pred_fallthru
      _
    // Predicated region
    $region34: #{tpu_custom_call.1} parent=1 // pred_check
      _
    $region35: #{tpu_custom_call.1} parent=1 // pred_check_branch
      %453 = sbr.rel (0) target = $region37
    $region36: #{tpu_custom_call.1} parent=1 // pred_region
      %454 = dma.done [#allocation4], 256
    $region37: #{tpu_custom_call.1} parent=1 // pred_fallthru
      _
    %455 = vsyncpa [#allocation4], 1

</llo_original>
